<compile_context>
chip_gen: v7x
topology: tpu7x:2x2x1
jax: 0.10.0
libtpu: 0.0.40
codegen_flags: <defaults>
</compile_context>

<pallas_src>
import functools
import math

import jax
import jax.numpy as jnp
from jax.experimental import pallas as pl
from jax.experimental.pallas import tpu as pltpu


def _round_up(v: int, m: int) -> int:
    return ((v + m - 1) // m) * m


def _cdiv(a: int, b: int) -> int:
    return -(-a // b)


def _pick_num_supergroups(dim: int, groups: int, target: int) -> int:
    """Largest divisor of `groups` such that each super-block keeps >= `target` channels."""
    n_sg = 1
    for cand in range(1, groups + 1):
        if groups % cand == 0 and dim % cand == 0 and (dim // cand) >= target:
            n_sg = cand
    return n_sg


# ----------------------------------------------------------------------------
# Pallas kernel: one Wav2Vec2PositionEncoderLayer tile
#   grouped conv1d (per-tap super-group matmuls) -> LayerNorm(D) -> exact GELU
#   Output stays in the padded layout; rows outside [off_out, off_out+t_valid)
#   are re-zeroed so the next stacked layer sees correct 'same' zero padding.
# ----------------------------------------------------------------------------
def pos_layer_kernel(xa_ref, xb_ref, w_ref, b_ref, g_ref, be_ref, o_ref,
                     win_ref, acc_ref, *, k, hr, off_out, t_valid):
    # xa_ref : (1, tt, D)  current tile of the padded input (compute dtype)
    # xb_ref : (1, hr, D)  right-halo rows (next hr rows of the padded input)
    # w_ref  : (k, n_sg, sb, sb) per-tap super-group block-diagonal weights
    # b_ref/g_ref/be_ref : (1, D) f32 bias / LN gamma / LN beta
    # o_ref  : (1, tt, D)  output tile (same padded layout as the input)
    # win_ref: (tt+hr, D)  conv window scratch (compute dtype)
    # acc_ref: (tt, D)     f32 conv accumulator scratch
    Tt = o_ref.shape[1]
    D = o_ref.shape[2]
    n_sg = w_ref.shape[1]
    sb = w_ref.shape[2]

    # Build the conv window: current tile + k-1 (rounded) halo rows. Aligned stores.
    win_ref[0:Tt, :] = xa_ref[0]
    win_ref[Tt:Tt + hr, :] = xb_ref[0]

    # Conv accumulator starts at the bias (f32).
    acc_ref[...] = jnp.broadcast_to(b_ref[...].astype(jnp.float32), (Tt, D))

    # Per-tap shifted matmuls on the MXU (operands in storage dtype, f32 acc).
    # Tap slices for t % 8 != 0 are sublane-shifted loads (XLU) - fine when MXU-bound.
    for t in range(k):                      # static unrolled tap loop
        xt = win_ref[t:t + Tt, :]           # (Tt, D)
        for s in range(n_sg):               # static unrolled super-group loop
            c0 = s * sb
            acc_ref[:, c0:c0 + sb] += jnp.dot(
                xt[:, c0:c0 + sb],
                w_ref[t, s],
                preferred_element_type=jnp.float32,
            )

    # LayerNorm over D (nn.LayerNorm default eps=1e-5), in f32.
    h = acc_ref[...]
    mean = jnp.mean(h, axis=-1, keepdims=True)
    var = jnp.mean(jnp.square(h - mean), axis=-1, keepdims=True)
    h = (h - mean) * jax.lax.rsqrt(var + 1e-5)
    h = h * g_ref[...].astype(jnp.float32) + be_ref[...].astype(jnp.float32)

    # exact GELU (nn.GELU default uses erf)
    h = 0.5 * h * (1.0 + jax.lax.erf(h * (1.0 / math.sqrt(2.0))))

    # Re-zero everything outside the valid rows so the chained layers see proper
    # zero 'same' padding (uses a select, so any junk in slack tiles cannot leak).
    row0 = pl.program_id(1) * Tt
    rows = row0 + jax.lax.broadcasted_iota(jnp.int32, (Tt, 1), 0)
    valid = (rows >= off_out) & (rows < off_out + t_valid)
    o_ref[0] = jnp.where(valid, h, 0.0).astype(o_ref.dtype)


# ----------------------------------------------------------------------------
# One layer on the shared padded buffer
# ----------------------------------------------------------------------------
def _pos_conv_layer_padded(xp, w_sg, bias, gamma, beta, *, k, off_out, t_valid,
                           tt, hr, vmem_limit_bytes):
    """xp: (B, L, D) padded buffer; returns (B, L, D) with valid rows [off_out, off_out+t_valid)."""
    B, L, D = xp.shape
    _, n_sg, sb, _ = w_sg.shape
    n_tiles = L // tt
    halo_blocks_per_tile = tt // hr
    n_halo_blocks = L // hr

    kern = functools.partial(pos_layer_kernel, k=k, hr=hr,
                             off_out=off_out, t_valid=t_valid)

    def halo_map(b, j):
        # clamped: the last (slack) tile's output is fully masked, so its halo content
        # is irrelevant; clamping just keeps the DMA in-bounds.
        blk = jnp.minimum((j + 1) * halo_blocks_per_tile, n_halo_blocks - 1)
        return (b, blk, 0)

    return pl.pallas_call(
        kern,
        out_shape=jax.ShapeDtypeStruct((B, L, D), xp.dtype),
        grid=(B, n_tiles),
        in_specs=[
            pl.BlockSpec((1, tt, D), lambda b, j: (b, j, 0)),        # current tile
            pl.BlockSpec((1, hr, D), halo_map),                      # right halo rows
            pl.BlockSpec((k, n_sg, sb, sb), lambda b, j: (0, 0, 0, 0)),
            pl.BlockSpec((1, D), lambda b, j: (0, 0)),               # bias
            pl.BlockSpec((1, D), lambda b, j: (0, 0)),               # LN gamma
            pl.BlockSpec((1, D), lambda b, j: (0, 0)),               # LN beta
        ],
        out_specs=pl.BlockSpec((1, tt, D), lambda b, j: (b, j, 0)),
        scratch_shapes=[
            pltpu.VMEM((tt + hr, D), xp.dtype),    # conv window
            pltpu.VMEM((tt, D), jnp.float32),      # f32 accumulator
        ],
        compiler_params=pltpu.CompilerParams(
            dimension_semantics=("parallel", "parallel"),
            vmem_limit_bytes=vmem_limit_bytes,
        ),
    )(
        xp, xp, w_sg.astype(xp.dtype),
        bias.reshape(1, D).astype(jnp.float32),
        gamma.reshape(1, D).astype(jnp.float32),
        beta.reshape(1, D).astype(jnp.float32),
    )


# ----------------------------------------------------------------------------
# Wav2Vec2StackedPositionEncoder forward
# ----------------------------------------------------------------------------
def stacked_position_encoder(x, params, mask=None, compute_dtype=None,
                             t_tile=256, vmem_limit_bytes=64 * 1024 * 1024):
    """x: (B, T, D); mask: optional (B, T) bool. Returns (B, T, D) in x.dtype."""
    B, T, D = x.shape
    orig_dtype = x.dtype
    cd = compute_dtype if compute_dtype is not None else x.dtype
    depth = len(params)
    assert depth >= 1
    k = params[0]["k"]
    pad_left = params[0]["pad_left"]
    assert all(p["k"] == k and p["pad_left"] == pad_left for p in params)

    # Row granularity respecting the native sublane packing of the compute dtype.
    sub = 8 * max(1, 4 // jnp.dtype(cd).itemsize)
    hr = _round_up(k - 1, sub)                      # halo rows
    tt = _round_up(max(int(t_tile), hr, sub), hr)   # tile rows (multiple of hr)

    # One slack tile so the last compute tile is always fully-masked / never needs a halo.
    n_tiles = _cdiv((depth - 1) * pad_left + T, tt) + 1
    L = n_tiles * tt

    h = x
    if mask is not None:
        h = jnp.where(mask[..., None], h, jnp.zeros((), h.dtype))

    # Single zero pad for the whole stack. Layer l's output keeps the same padded
    # layout with its valid rows shifted left by pad_left, so no per-layer re-pad.
    off = depth * pad_left
    xp = jnp.pad(h.astype(cd), ((0, 0), (off, L - off - T), (0, 0)))

    for p in params:
        off -= pad_left
        xp = _pos_conv_layer_padded(
            xp, p["w_sg"], p["bias"], p["gamma"], p["beta"],
            k=k, off_out=off, t_valid=T, tt=tt, hr=hr,
            vmem_limit_bytes=vmem_limit_bytes,
        )

    out = xp[:, :T, :].astype(orig_dtype)   # off == 0 after the last layer
    if mask is not None:
        out = jnp.where(mask[..., None], out, jnp.zeros((), out.dtype))
    return out


# ----------------------------------------------------------------------------
# Deterministic parameter construction (matches module __init__ shapes)
# ----------------------------------------------------------------------------
def init_params(key, depth, dim, kernel_size, groups, sg_target=128):
    k = max(3, kernel_size // depth)
    dpg = dim // groups
    pad_total = k - 1
    pad_left = pad_total // 2            # PyTorch 'same': extra pad (if any) on the right
    pad_right = pad_total - pad_left

    # Super-group packing: each super-block holds groups//n_sg groups (sb = dim // n_sg
    # channels), block-diagonal inside.  sg_target ~128 (v5e MXU) / ~256 (v6e/v7x).
    n_sg = _pick_num_supergroups(dim, groups, sg_target)
    sb = dim // n_sg
    gps = groups // n_sg

    params = []
    for _ in range(depth):
        key, wk, bk, gk, ek = jax.random.split(key, 5)
        std = (4.0 / (k * dim)) ** 0.5
        # PyTorch grouped Conv1d weight: (out=dim, in_per_group=dim//groups, k)
        # NOTE: torch weight_norm is a training-time re-parameterization; the forward
        # only sees the effective weight, which is what we store here.
        w_torch = jax.random.normal(wk, (dim, dpg, k), jnp.float32) * std

        # Pack into per-tap, per-super-group (in, out) dense blocks.
        w_sg = jnp.zeros((k, n_sg, sb, sb), jnp.float32)
        for s in range(n_sg):
            for a in range(gps):
                g = s * gps + a
                blk = w_torch[g * dpg:(g + 1) * dpg]          # (dpg_out, dpg_in, k)
                w_sg = w_sg.at[:, s,
                               a * dpg:(a + 1) * dpg,          # in-channel rows
                               a * dpg:(a + 1) * dpg].set(     # out-channel cols
                    jnp.transpose(blk, (2, 1, 0)))              # (k, dpg_in, dpg_out)

        # Non-trivial bias / LN params so the padded-row re-zeroing path is exercised.
        params.append(dict(
            w_torch=w_torch, w_sg=w_sg,
            bias=0.1 * jax.random.normal(bk, (dim,), jnp.float32),
            gamma=1.0 + 0.1 * jax.random.normal(gk, (dim,), jnp.float32),
            beta=0.1 * jax.random.normal(ek, (dim,), jnp.float32),
            pad_left=pad_left, pad_right=pad_right, k=k,
        ))
    return params


# ----------------------------------------------------------------------------
# Pure-JAX reference (mirrors the PyTorch forward exactly) for verification
# ----------------------------------------------------------------------------
def reference_forward(x, params, groups, mask=None):
    if mask is not None:
        x = jnp.where(mask[..., None], x, 0.0)
    h = jnp.transpose(x, (0, 2, 1))  # (B, D, T) like PyTorch
    for p in params:
        h = jax.lax.conv_general_dilated(
            h, p["w_torch"], window_strides=(1,),
            padding=[(p["pad_left"], p["pad_right"])],
            dimension_numbers=("NCH", "OIH", "NCH"),
            feature_group_count=groups,
        ) + p["bias"][None, :, None]
        hT = jnp.transpose(h, (0, 2, 1))
        mean = hT.mean(-1, keepdims=True)
        var = ((hT - mean) ** 2).mean(-1, keepdims=True)
        hT = (hT - mean) * jax.lax.rsqrt(var + 1e-5) * p["gamma"] + p["beta"]
        h = jnp.transpose(hT, (0, 2, 1))
        h = 0.5 * h * (1.0 + jax.lax.erf(h / math.sqrt(2.0)))
    x = jnp.transpose(h, (0, 2, 1))
    if mask is not None:
        x = jnp.where(mask[..., None], x, 0.0)
    return x


if __name__ == "__main__":
    # Small shapes consistent with the module: x is (B, T, dim)
    B, T, DIM = 2, 16, 32
    DEPTH, KERNEL_SIZE, GROUPS = 2, 7, 4     # -> per-layer k = max(3, 7 // 2) = 3

    key = jax.random.PRNGKey(0)
    kx, kp = jax.random.split(key)
    x = jax.random.normal(kx, (B, T, DIM), jnp.float32)
    lengths = jnp.array([T, T - 4], jnp.int32)
    mask = jnp.arange(T)[None, :] < lengths[:, None]     # (B, T) bool

    # sg_target=16 so the tiny demo dims still exercise the super-group (block-diag)
    # packing path; production would use 128 (v5e) / 256 (v6e, v7x).
    params = init_params(kp, DEPTH, DIM, KERNEL_SIZE, GROUPS, sg_target=16)

    ref = reference_forward(x, params, GROUPS, mask=mask)

    # fp32 compute path, small T-tile so the multi-tile (halo + chained-padding) path
    # is exercised.
    out = stacked_position_encoder(x, params, mask=mask,
                                   compute_dtype=jnp.float32, t_tile=8)
    out = jax.block_until_ready(out)
    assert out.shape == (B, T, DIM)
    assert jnp.allclose(out, ref, rtol=1e-4, atol=1e-4), "fp32 mismatch vs JAX reference"

    # bf16 MXU-operand path (production setting): loose numerical check only.
    out_bf16 = stacked_position_encoder(x, params, mask=mask,
                                        compute_dtype=jnp.bfloat16, t_tile=256)
    out_bf16 = jax.block_until_ready(out_bf16)
    assert out_bf16.shape == (B, T, DIM)
    assert bool(jnp.all(jnp.isfinite(out_bf16.astype(jnp.float32))))
    assert jnp.allclose(out_bf16.astype(jnp.float32), ref, rtol=0.25, atol=0.25), \
        "bf16 path grossly wrong"

    print("KERNEL_OK")
</pallas_src>

<mosaic_0001>
module attributes {stable_mosaic.version = 11 : i64} {
  func.func @pos_layer_kernel(%arg0: i32, %arg1: i32, %arg2: memref<1x8x32xf32, #tpu.memory_space<vmem>>, %arg3: memref<1x8x32xf32, #tpu.memory_space<vmem>>, %arg4: memref<3x2x16x16xf32, #tpu.memory_space<vmem>>, %arg5: memref<1x32xf32, #tpu.memory_space<vmem>>, %arg6: memref<1x32xf32, #tpu.memory_space<vmem>>, %arg7: memref<1x32xf32, #tpu.memory_space<vmem>>, %arg8: memref<1x8x32xf32, #tpu.memory_space<vmem>>, %arg9: memref<16x32xf32, #tpu.memory_space<vmem>>, %arg10: memref<8x32xf32, #tpu.memory_space<vmem>>) attributes {dimension_semantics = [#tpu.dimension_semantics<parallel>, #tpu.dimension_semantics<parallel>], iteration_bounds = array<i64: 2, 4>, scalar_prefetch = 0 : i64, scratch_operands = 2 : i64, tpu.core_type = #tpu.core_type<tc>, window_params = [{transform_indices = @transform_0, window_bounds = array<i64: 1, 8, 32>}, {transform_indices = @transform_1, window_bounds = array<i64: 1, 8, 32>}, {pipeline_mode = #tpu.pipeline_mode<synchronous>, transform_indices = @transform_2, window_bounds = array<i64: 3, 2, 16, 16>}, {pipeline_mode = #tpu.pipeline_mode<synchronous>, transform_indices = @transform_3, window_bounds = array<i64: 1, 32>}, {pipeline_mode = #tpu.pipeline_mode<synchronous>, transform_indices = @transform_4, window_bounds = array<i64: 1, 32>}, {pipeline_mode = #tpu.pipeline_mode<synchronous>, transform_indices = @transform_5, window_bounds = array<i64: 1, 32>}, {transform_indices = @transform_6, window_bounds = array<i64: 1, 8, 32>}]} {
    %c0 = arith.constant 0 : index
    %c0_0 = arith.constant 0 : index
    %c0_1 = arith.constant 0 : index
    %0 = vector.load %arg2[%c0, %c0_0, %c0_1] : memref<1x8x32xf32, #tpu.memory_space<vmem>>, vector<1x8x32xf32>
    %1 = vector.shape_cast %0 : vector<1x8x32xf32> to vector<8x32xf32>
    %c0_2 = arith.constant 0 : index
    %c0_3 = arith.constant 0 : index
    %2 = vector.load %arg9[%c0_2, %c0_3] : memref<16x32xf32, #tpu.memory_space<vmem>>, vector<8x32xf32>
    tpu.vector_store %arg9[%c0_2, %c0_3], %1 {strides = array<i32>} : memref<16x32xf32, #tpu.memory_space<vmem>>, vector<8x32xf32>,
    %c0_4 = arith.constant 0 : index
    %c0_5 = arith.constant 0 : index
    %c0_6 = arith.constant 0 : index
    %3 = vector.load %arg3[%c0_4, %c0_5, %c0_6] : memref<1x8x32xf32, #tpu.memory_space<vmem>>, vector<1x8x32xf32>
    %4 = vector.shape_cast %3 : vector<1x8x32xf32> to vector<8x32xf32>
    %c8 = arith.constant 8 : index
    %c0_7 = arith.constant 0 : index
    %5 = vector.load %arg9[%c8, %c0_7] : memref<16x32xf32, #tpu.memory_space<vmem>>, vector<8x32xf32>
    tpu.vector_store %arg9[%c8, %c0_7], %4 {strides = array<i32>} : memref<16x32xf32, #tpu.memory_space<vmem>>, vector<8x32xf32>,
    %c0_8 = arith.constant 0 : index
    %c0_9 = arith.constant 0 : index
    %6 = vector.load %arg5[%c0_8, %c0_9] : memref<1x32xf32, #tpu.memory_space<vmem>>, vector<1x32xf32>
    %7 = vector.shape_cast %6 : vector<1x32xf32> to vector<1x32xf32>
    %8 = vector.broadcast %7 : vector<1x32xf32> to vector<8x32xf32>
    %c0_10 = arith.constant 0 : index
    %c0_11 = arith.constant 0 : index
    %9 = vector.load %arg10[%c0_10, %c0_11] : memref<8x32xf32, #tpu.memory_space<vmem>>, vector<8x32xf32>
    tpu.vector_store %arg10[%c0_10, %c0_11], %8 {strides = array<i32>} : memref<8x32xf32, #tpu.memory_space<vmem>>, vector<8x32xf32>,
    %c0_12 = arith.constant 0 : index
    %c0_13 = arith.constant 0 : index
    %10 = vector.load %arg9[%c0_12, %c0_13] : memref<16x32xf32, #tpu.memory_space<vmem>>, vector<8x32xf32>
    %c0_14 = arith.constant 0 : index
    %c0_15 = arith.constant 0 : index
    %11 = vector.load %arg10[%c0_14, %c0_15] : memref<8x32xf32, #tpu.memory_space<vmem>>, vector<8x16xf32>
    %12 = vector.extract_strided_slice %10 {offsets = [0, 0], sizes = [8, 16], strides = [1, 1]} : vector<8x32xf32> to vector<8x16xf32>
    %c0_16 = arith.constant 0 : index
    %c0_17 = arith.constant 0 : index
    %c0_18 = arith.constant 0 : index
    %c0_19 = arith.constant 0 : index
    %13 = vector.load %arg4[%c0_16, %c0_17, %c0_18, %c0_19] : memref<3x2x16x16xf32, #tpu.memory_space<vmem>>, vector<1x1x16x16xf32>
    %14 = vector.shape_cast %13 : vector<1x1x16x16xf32> to vector<16x16xf32>
    %cst = arith.constant dense<0.000000e+00> : vector<8x16xf32>
    %15 = tpu.matmul %12, %14, %cst {dimension_numbers = #tpu.dot_dimension_numbers<[1], [0], [0], [1], [0, 0, 1, 1], [], []>} : vector<8x16xf32>, vector<16x16xf32>, vector<8x16xf32> -> vector<8x16xf32>
    %16 = arith.addf %11, %15 : vector<8x16xf32>
    %c0_20 = arith.constant 0 : index
    %c0_21 = arith.constant 0 : index
    %17 = vector.load %arg10[%c0_20, %c0_21] : memref<8x32xf32, #tpu.memory_space<vmem>>, vector<8x16xf32>
    tpu.vector_store %arg10[%c0_20, %c0_21], %16 {strides = array<i32>} : memref<8x32xf32, #tpu.memory_space<vmem>>, vector<8x16xf32>,
    %c0_22 = arith.constant 0 : index
    %c16 = arith.constant 16 : index
    %18 = vector.load %arg10[%c0_22, %c16] : memref<8x32xf32, #tpu.memory_space<vmem>>, vector<8x16xf32>
    %19 = vector.extract_strided_slice %10 {offsets = [0, 16], sizes = [8, 16], strides = [1, 1]} : vector<8x32xf32> to vector<8x16xf32>
    %c0_23 = arith.constant 0 : index
    %c1 = arith.constant 1 : index
    %c0_24 = arith.constant 0 : index
    %c0_25 = arith.constant 0 : index
    %20 = vector.load %arg4[%c0_23, %c1, %c0_24, %c0_25] : memref<3x2x16x16xf32, #tpu.memory_space<vmem>>, vector<1x1x16x16xf32>
    %21 = vector.shape_cast %20 : vector<1x1x16x16xf32> to vector<16x16xf32>
    %cst_26 = arith.constant dense<0.000000e+00> : vector<8x16xf32>
    %22 = tpu.matmul %19, %21, %cst_26 {dimension_numbers = #tpu.dot_dimension_numbers<[1], [0], [0], [1], [0, 0, 1, 1], [], []>} : vector<8x16xf32>, vector<16x16xf32>, vector<8x16xf32> -> vector<8x16xf32>
    %23 = arith.addf %18, %22 : vector<8x16xf32>
    %c0_27 = arith.constant 0 : index
    %c16_28 = arith.constant 16 : index
    %24 = vector.load %arg10[%c0_27, %c16_28] : memref<8x32xf32, #tpu.memory_space<vmem>>, vector<8x16xf32>
    tpu.vector_store %arg10[%c0_27, %c16_28], %23 {strides = array<i32>} : memref<8x32xf32, #tpu.memory_space<vmem>>, vector<8x16xf32>,
    %c1_29 = arith.constant 1 : index
    %c0_30 = arith.constant 0 : index
    %25 = vector.load %arg9[%c1_29, %c0_30] : memref<16x32xf32, #tpu.memory_space<vmem>>, vector<8x32xf32>
    %c0_31 = arith.constant 0 : index
    %c0_32 = arith.constant 0 : index
    %26 = vector.load %arg10[%c0_31, %c0_32] : memref<8x32xf32, #tpu.memory_space<vmem>>, vector<8x16xf32>
    %27 = vector.extract_strided_slice %25 {offsets = [0, 0], sizes = [8, 16], strides = [1, 1]} : vector<8x32xf32> to vector<8x16xf32>
    %c1_33 = arith.constant 1 : index
    %c0_34 = arith.constant 0 : index
    %c0_35 = arith.constant 0 : index
    %c0_36 = arith.constant 0 : index
    %28 = vector.load %arg4[%c1_33, %c0_34, %c0_35, %c0_36] : memref<3x2x16x16xf32, #tpu.memory_space<vmem>>, vector<1x1x16x16xf32>
    %29 = vector.shape_cast %28 : vector<1x1x16x16xf32> to vector<16x16xf32>
    %cst_37 = arith.constant dense<0.000000e+00> : vector<8x16xf32>
    %30 = tpu.matmul %27, %29, %cst_37 {dimension_numbers = #tpu.dot_dimension_numbers<[1], [0], [0], [1], [0, 0, 1, 1], [], []>} : vector<8x16xf32>, vector<16x16xf32>, vector<8x16xf32> -> vector<8x16xf32>
    %31 = arith.addf %26, %30 : vector<8x16xf32>
    %c0_38 = arith.constant 0 : index
    %c0_39 = arith.constant 0 : index
    %32 = vector.load %arg10[%c0_38, %c0_39] : memref<8x32xf32, #tpu.memory_space<vmem>>, vector<8x16xf32>
    tpu.vector_store %arg10[%c0_38, %c0_39], %31 {strides = array<i32>} : memref<8x32xf32, #tpu.memory_space<vmem>>, vector<8x16xf32>,
    %c0_40 = arith.constant 0 : index
    %c16_41 = arith.constant 16 : index
    %33 = vector.load %arg10[%c0_40, %c16_41] : memref<8x32xf32, #tpu.memory_space<vmem>>, vector<8x16xf32>
    %34 = vector.extract_strided_slice %25 {offsets = [0, 16], sizes = [8, 16], strides = [1, 1]} : vector<8x32xf32> to vector<8x16xf32>
    %c1_42 = arith.constant 1 : index
    %c1_43 = arith.constant 1 : index
    %c0_44 = arith.constant 0 : index
    %c0_45 = arith.constant 0 : index
    %35 = vector.load %arg4[%c1_42, %c1_43, %c0_44, %c0_45] : memref<3x2x16x16xf32, #tpu.memory_space<vmem>>, vector<1x1x16x16xf32>
    %36 = vector.shape_cast %35 : vector<1x1x16x16xf32> to vector<16x16xf32>
    %cst_46 = arith.constant dense<0.000000e+00> : vector<8x16xf32>
    %37 = tpu.matmul %34, %36, %cst_46 {dimension_numbers = #tpu.dot_dimension_numbers<[1], [0], [0], [1], [0, 0, 1, 1], [], []>} : vector<8x16xf32>, vector<16x16xf32>, vector<8x16xf32> -> vector<8x16xf32>
    %38 = arith.addf %33, %37 : vector<8x16xf32>
    %c0_47 = arith.constant 0 : index
    %c16_48 = arith.constant 16 : index
    %39 = vector.load %arg10[%c0_47, %c16_48] : memref<8x32xf32, #tpu.memory_space<vmem>>, vector<8x16xf32>
    tpu.vector_store %arg10[%c0_47, %c16_48], %38 {strides = array<i32>} : memref<8x32xf32, #tpu.memory_space<vmem>>, vector<8x16xf32>,
    %c2 = arith.constant 2 : index
    %c0_49 = arith.constant 0 : index
    %40 = vector.load %arg9[%c2, %c0_49] : memref<16x32xf32, #tpu.memory_space<vmem>>, vector<8x32xf32>
    %c0_50 = arith.constant 0 : index
    %c0_51 = arith.constant 0 : index
    %41 = vector.load %arg10[%c0_50, %c0_51] : memref<8x32xf32, #tpu.memory_space<vmem>>, vector<8x16xf32>
    %42 = vector.extract_strided_slice %40 {offsets = [0, 0], sizes = [8, 16], strides = [1, 1]} : vector<8x32xf32> to vector<8x16xf32>
    %c2_52 = arith.constant 2 : index
    %c0_53 = arith.constant 0 : index
    %c0_54 = arith.constant 0 : index
    %c0_55 = arith.constant 0 : index
    %43 = vector.load %arg4[%c2_52, %c0_53, %c0_54, %c0_55] : memref<3x2x16x16xf32, #tpu.memory_space<vmem>>, vector<1x1x16x16xf32>
    %44 = vector.shape_cast %43 : vector<1x1x16x16xf32> to vector<16x16xf32>
    %cst_56 = arith.constant dense<0.000000e+00> : vector<8x16xf32>
    %45 = tpu.matmul %42, %44, %cst_56 {dimension_numbers = #tpu.dot_dimension_numbers<[1], [0], [0], [1], [0, 0, 1, 1], [], []>} : vector<8x16xf32>, vector<16x16xf32>, vector<8x16xf32> -> vector<8x16xf32>
    %46 = arith.addf %41, %45 : vector<8x16xf32>
    %c0_57 = arith.constant 0 : index
    %c0_58 = arith.constant 0 : index
    %47 = vector.load %arg10[%c0_57, %c0_58] : memref<8x32xf32, #tpu.memory_space<vmem>>, vector<8x16xf32>
    tpu.vector_store %arg10[%c0_57, %c0_58], %46 {strides = array<i32>} : memref<8x32xf32, #tpu.memory_space<vmem>>, vector<8x16xf32>,
    %c0_59 = arith.constant 0 : index
    %c16_60 = arith.constant 16 : index
    %48 = vector.load %arg10[%c0_59, %c16_60] : memref<8x32xf32, #tpu.memory_space<vmem>>, vector<8x16xf32>
    %49 = vector.extract_strided_slice %40 {offsets = [0, 16], sizes = [8, 16], strides = [1, 1]} : vector<8x32xf32> to vector<8x16xf32>
    %c2_61 = arith.constant 2 : index
    %c1_62 = arith.constant 1 : index
    %c0_63 = arith.constant 0 : index
    %c0_64 = arith.constant 0 : index
    %50 = vector.load %arg4[%c2_61, %c1_62, %c0_63, %c0_64] : memref<3x2x16x16xf32, #tpu.memory_space<vmem>>, vector<1x1x16x16xf32>
    %51 = vector.shape_cast %50 : vector<1x1x16x16xf32> to vector<16x16xf32>
    %cst_65 = arith.constant dense<0.000000e+00> : vector<8x16xf32>
    %52 = tpu.matmul %49, %51, %cst_65 {dimension_numbers = #tpu.dot_dimension_numbers<[1], [0], [0], [1], [0, 0, 1, 1], [], []>} : vector<8x16xf32>, vector<16x16xf32>, vector<8x16xf32> -> vector<8x16xf32>
    %53 = arith.addf %48, %52 : vector<8x16xf32>
    %c0_66 = arith.constant 0 : index
    %c16_67 = arith.constant 16 : index
    %54 = vector.load %arg10[%c0_66, %c16_67] : memref<8x32xf32, #tpu.memory_space<vmem>>, vector<8x16xf32>
    tpu.vector_store %arg10[%c0_66, %c16_67], %53 {strides = array<i32>} : memref<8x32xf32, #tpu.memory_space<vmem>>, vector<8x16xf32>,
    %c0_68 = arith.constant 0 : index
    %c0_69 = arith.constant 0 : index
    %55 = vector.load %arg10[%c0_68, %c0_69] : memref<8x32xf32, #tpu.memory_space<vmem>>, vector<8x32xf32>
    %cst_70 = arith.constant dense<0.000000e+00> : vector<8xf32>
    %56 = vector.multi_reduction <add>, %55, %cst_70 [1] : vector<8x32xf32> to vector<8xf32>
    %57 = vector.shape_cast %56 : vector<8xf32> to vector<8x1xf32>
    %cst_71 = arith.constant 3.200000e+01 : f32
    %58 = vector.broadcast %cst_71 : f32 to vector<8x1xf32>
    %59 = arith.divf %57, %58 : vector<8x1xf32>
    %60 = vector.broadcast %59 : vector<8x1xf32> to vector<8x32xf32>
    %61 = arith.subf %55, %60 : vector<8x32xf32>
    %62 = arith.mulf %61, %61 : vector<8x32xf32>
    %cst_72 = arith.constant dense<0.000000e+00> : vector<8xf32>
    %63 = vector.multi_reduction <add>, %62, %cst_72 [1] : vector<8x32xf32> to vector<8xf32>
    %64 = vector.shape_cast %63 : vector<8xf32> to vector<8x1xf32>
    %cst_73 = arith.constant 3.200000e+01 : f32
    %65 = vector.broadcast %cst_73 : f32 to vector<8x1xf32>
    %66 = arith.divf %64, %65 : vector<8x1xf32>
    %67 = vector.broadcast %59 : vector<8x1xf32> to vector<8x32xf32>
    %68 = arith.subf %55, %67 : vector<8x32xf32>
    %cst_74 = arith.constant 9.99999974E-6 : f32
    %69 = vector.broadcast %cst_74 : f32 to vector<8x1xf32>
    %70 = arith.addf %66, %69 : vector<8x1xf32>
    %71 = math.rsqrt %70 : vector<8x1xf32>
    %72 = vector.broadcast %71 : vector<8x1xf32> to vector<8x32xf32>
    %73 = arith.mulf %68, %72 : vector<8x32xf32>
    %c0_75 = arith.constant 0 : index
    %c0_76 = arith.constant 0 : index
    %74 = vector.load %arg6[%c0_75, %c0_76] : memref<1x32xf32, #tpu.memory_space<vmem>>, vector<1x32xf32>
    %75 = vector.broadcast %74 : vector<1x32xf32> to vector<8x32xf32>
    %76 = arith.mulf %73, %75 : vector<8x32xf32>
    %c0_77 = arith.constant 0 : index
    %c0_78 = arith.constant 0 : index
    %77 = vector.load %arg7[%c0_77, %c0_78] : memref<1x32xf32, #tpu.memory_space<vmem>>, vector<1x32xf32>
    %78 = vector.broadcast %77 : vector<1x32xf32> to vector<8x32xf32>
    %79 = arith.addf %76, %78 : vector<8x32xf32>
    %cst_79 = arith.constant 5.000000e-01 : f32
    %80 = vector.broadcast %cst_79 : f32 to vector<8x32xf32>
    %81 = arith.mulf %80, %79 : vector<8x32xf32>
    %cst_80 = arith.constant 0.707106769 : f32
    %82 = vector.broadcast %cst_80 : f32 to vector<8x32xf32>
    %83 = arith.mulf %79, %82 : vector<8x32xf32>
    %84 = math.erf %83 : vector<8x32xf32>
    %cst_81 = arith.constant 1.000000e+00 : f32
    %85 = vector.broadcast %cst_81 : f32 to vector<8x32xf32>
    %86 = arith.addf %85, %84 : vector<8x32xf32>
    %87 = arith.mulf %81, %86 : vector<8x32xf32>
    %c8_i32 = arith.constant 8 : i32
    %88 = arith.muli %arg1, %c8_i32 : i32
    %89 = tpu.iota {dimensions = array<i32: 0>} : vector<8x1xi32>
    %90 = vector.broadcast %88 : i32 to vector<8x1xi32>
    %91 = arith.addi %90, %89 : vector<8x1xi32>
    %c1_i32 = arith.constant 1 : i32
    %92 = vector.broadcast %c1_i32 : i32 to vector<8x1xi32>
    %93 = arith.cmpi sge, %91, %92 : vector<8x1xi32>
    %c17_i32 = arith.constant 17 : i32
    %94 = vector.broadcast %c17_i32 : i32 to vector<8x1xi32>
    %95 = arith.cmpi slt, %91, %94 : vector<8x1xi32>
    %96 = arith.andi %93, %95 : vector<8x1xi1>
    %cst_82 = arith.constant 0.000000e+00 : f32
    %97 = vector.shape_cast %96 : vector<8x1xi1> to vector<8x1xi1>
    %98 = vector.broadcast %97 : vector<8x1xi1> to vector<8x32xi1>
    %99 = vector.broadcast %cst_82 : f32 to vector<8x32xf32>
    %100 = arith.select %98, %87, %99 : vector<8x32xi1>, vector<8x32xf32>
    %c0_83 = arith.constant 0 : index
    %c0_84 = arith.constant 0 : index
    %c0_85 = arith.constant 0 : index
    %101 = vector.load %arg8[%c0_83, %c0_84, %c0_85] : memref<1x8x32xf32, #tpu.memory_space<vmem>>, vector<1x8x32xf32>
    %102 = vector.shape_cast %101 : vector<1x8x32xf32> to vector<8x32xf32>
    %103 = vector.shape_cast %100 : vector<8x32xf32> to vector<1x8x32xf32>
    tpu.vector_store %arg8[%c0_83, %c0_84, %c0_85], %103 {strides = array<i32>} : memref<1x8x32xf32, #tpu.memory_space<vmem>>, vector<1x8x32xf32>,
    return
  }
  func.func @transform_0(%arg0: i32, %arg1: i32) -> (i32, i32, i32) {
    %c0_i32 = arith.constant 0 : i32
    %c0_i32_0 = arith.constant 0 : i32
    return %arg0, %arg1, %c0_i32 : i32, i32, i32
  }
  func.func @transform_1(%arg0: i32, %arg1: i32) -> (i32, i32, i32) {
    %c1_i32 = arith.constant 1 : i32
    %0 = arith.addi %arg1, %c1_i32 : i32
    %c1_i32_0 = arith.constant 1 : i32
    %1 = arith.muli %0, %c1_i32_0 : i32
    %c3_i32 = arith.constant 3 : i32
    %2 = arith.minsi %1, %c3_i32 : i32
    %c0_i32 = arith.constant 0 : i32
    %c0_i32_1 = arith.constant 0 : i32
    return %arg0, %2, %c0_i32 : i32, i32, i32
  }
  func.func @transform_2(%arg0: i32, %arg1: i32) -> (i32, i32, i32, i32) {
    %c0_i32 = arith.constant 0 : i32
    %c0_i32_0 = arith.constant 0 : i32
    %c0_i32_1 = arith.constant 0 : i32
    %c0_i32_2 = arith.constant 0 : i32
    %c0_i32_3 = arith.constant 0 : i32
    return %c0_i32, %c0_i32_0, %c0_i32_1, %c0_i32_2 : i32, i32, i32, i32
  }
  func.func @transform_3(%arg0: i32, %arg1: i32) -> (i32, i32) {
    %c0_i32 = arith.constant 0 : i32
    %c0_i32_0 = arith.constant 0 : i32
    %c0_i32_1 = arith.constant 0 : i32
    return %c0_i32, %c0_i32_0 : i32, i32
  }
  func.func @transform_4(%arg0: i32, %arg1: i32) -> (i32, i32) {
    %c0_i32 = arith.constant 0 : i32
    %c0_i32_0 = arith.constant 0 : i32
    %c0_i32_1 = arith.constant 0 : i32
    return %c0_i32, %c0_i32_0 : i32, i32
  }
  func.func @transform_5(%arg0: i32, %arg1: i32) -> (i32, i32) {
    %c0_i32 = arith.constant 0 : i32
    %c0_i32_0 = arith.constant 0 : i32
    %c0_i32_1 = arith.constant 0 : i32
    return %c0_i32, %c0_i32_0 : i32, i32
  }
  func.func @transform_6(%arg0: i32, %arg1: i32) -> (i32, i32, i32) {
    %c0_i32 = arith.constant 0 : i32
    %c0_i32_0 = arith.constant 0 : i32
    return %arg0, %arg1, %c0_i32 : i32, i32, i32
  }
}

</mosaic_0001>

<llo_original>
// kernel: tpu_custom_call.1
$region0: #{tpu_custom_call.1}
  #allocation0 [shape = 'u32[]', space=smem, size = 0x4, offset = 0x4, fixed_abs, tag = 'smem constant byte address 0x4 - core index']
  #allocation1 [shape = 'u32[144,128]{1,0:T(1,128)}', space=vmem, size = 0x12000, scoped, tag = 'internal scratch']
  #allocation2 [shape = 'f32[16,32]{1,0:T(8,128)}', space=vmem, size = 0x2000, scoped, tag = 'scratch operand']
  #allocation3 [shape = 'f32[8,32]{1,0:T(8,128)}', space=vmem, size = 0x1000, scoped, tag = 'scratch operand']
  %s0 = inlined_call_operand.hbm [shape: f32[2,32,32], index: 0, kind: input, shape index: {}]
  %s1 = inlined_call_operand.hbm [shape: f32[2,32,32], index: 1, kind: input, shape index: {}]
  %s2 = inlined_call_operand.hbm [shape: f32[3,2,16,16], index: 2, kind: input, shape index: {}]
  %s3 = inlined_call_operand.hbm [shape: f32[1,32], index: 3, kind: input, shape index: {}]
  %s4 = inlined_call_operand.hbm [shape: f32[1,32], index: 4, kind: input, shape index: {}]
  %s5 = inlined_call_operand.hbm [shape: f32[1,32], index: 5, kind: input, shape index: {}]
  %s6 = inlined_call_operand.hbm [shape: f32[2,32,32], index: 6, kind: output, shape index: {}]
  %s7 = sld [smem:[#allocation0]]
  $region81: #{tpu_custom_call.1} parent=0
    _
  %s9 = ssub.s32 1, %s7
  %s10 = scalar_select 0, %s9, %s7
  $region1: #{tpu_custom_call.1} parent=0
    #allocation4 [shape = 'u8[8192]{0}', space=vmem, size = 0x2000, scoped, tag = 'input window, operand 0']
    #allocation5 [shape = 's32[2]{0}', space=sflag, size = 0x8, scoped, tag = 'scoped memory for tpu_custom_call.1']
    #allocation6 [shape = 's32[2]{0}', space=sflag, size = 0x8, scoped, tag = 'scoped memory for tpu_custom_call.1']
    #allocation7 [shape = 'u8[8192]{0}', space=vmem, size = 0x2000, scoped, tag = 'input window, operand 1']
    #allocation8 [shape = 's32[2]{0}', space=sflag, size = 0x8, scoped, tag = 'scoped memory for tpu_custom_call.1']
    #allocation9 [shape = 'u8[49152]{0}', space=vmem, size = 0xc000, scoped, tag = 'input window, operand 2, single buffered']
    #allocation10 [shape = 'u8[512]{0}', space=vmem, size = 0x400, scoped, tag = 'input window, operand 3, single buffered']
    #allocation11 [shape = 's32[1]{0}', space=sflag, size = 0x4, scoped, tag = 'scoped memory for tpu_custom_call.1']
    #allocation12 [shape = 'u8[512]{0}', space=vmem, size = 0x400, scoped, tag = 'input window, operand 4, single buffered']
    #allocation13 [shape = 'u8[512]{0}', space=vmem, size = 0x400, scoped, tag = 'input window, operand 5, single buffered']
    #allocation14 [shape = 's32[1]{0}', space=sflag, size = 0x4, scoped, tag = 'scoped memory for tpu_custom_call.1']
    #allocation15 [shape = 'u8[8192]{0}', space=vmem, size = 0x2000, scoped, tag = 'output window, operand 0']
    %11 = vsyncpa [#allocation5], 0
    %s12 = scalar_lea.sflag [#allocation5], 1
    %13 = vsyncpa %s12, 0
    %14 = vsyncpa [#allocation8], 0
    %s15 = scalar_lea.sflag [#allocation8], 1
    %16 = vsyncpa %s15, 0
    %17 = vsyncpa [#allocation11], 0
    %18 = vsyncpa [#allocation14], 0
    %19 = vsyncpa [#allocation6], 0
    %s20 = scalar_lea.sflag [#allocation6], 1
    %21 = vsyncpa %s20, 0
    loop: start=0, step=1, limit=10
    $region2: #{tpu_custom_call.1} parent=1 // loop_pre_header
      _
    $region3: #{tpu_custom_call.1} parent=1 // loop_header
      %s23 = sphi 0, %s27
      %p24 = scmp.ge.s32.totalorder %s23, 10
      %s30 = sphi 0, %s42
      %s31 = sphi 0, %s38
      %s32 = sphi 0, %s30
      %s33 = sphi 0, %s31
      %s34 = sphi 0, %s32
      %s35 = sphi 0, %s33
      %s47 = sphi 0, %s49
      %s50 = sphi 0, %s47
      %s51 = sphi 0, %s50
      %s67 = sphi 0, %s51
      %s81 = sphi 0, %s83
      %s84 = sphi 0, %s81
      %s85 = sphi 0, %s84
      %s101 = sphi 0, %s85
      %s105 = sphi 0, %s105
      %s107 = sphi 0, %s105
      %s108 = sphi 0, %s107
      %s122 = sphi 0, %s108
      %s126 = sphi 0, %s126
      %s128 = sphi 0, %s126
      %s129 = sphi 0, %s128
      %s143 = sphi 0, %s129
      %s147 = sphi 0, %s147
      %s149 = sphi 0, %s147
      %s150 = sphi 0, %s149
      %s164 = sphi 0, %s150
      %s168 = sphi 0, %s168
      %s170 = sphi 0, %s168
      %s171 = sphi 0, %s170
      %s185 = sphi 0, %s171
      %s193 = sphi 0, %s195
      %s196 = sphi 0, %s193
      %s197 = sphi 0, %s196
      %s213 = sphi 0, %s197
    $region4: #{tpu_custom_call.1} parent=1 // loop_header_branch
      %26 = sbr.rel (%p24) target = $region8
    $region5: #{tpu_custom_call.1} parent=1 // loop_body
      %s28 = ssub.s32 %s23, 1
      %s29 = ssub.s32 %s23, 2
      %s36 = sadd.s32 1, %s31
      %p37 = scmp.ge.s32.totalorder %s36, 4
      %s38 = scalar_select %p37, 0, %s36
      %s39 = sadd.s32 1, %s30
      %s40 = scalar_select %p37, %s39, %s30
      %p41 = scmp.ge.s32.totalorder %s40, 2
      %s42 = scalar_select %p41, 0, %s40
      %s43 = ssub.s32 %s30, %s42
      %s44 = ssub.s32 %s31, %s38
      %s45 = sor.u32 %s43, %s44
      %p46 = scmp.eq.s32.totalorder %s45, 0
      %s48 = sadd.s32 %s47, 1
      %s49 = scalar_select %p46, %s47, %s48
      %p52 = pneg %p46
      %p53 = scmp.eq.s32.totalorder %s23, 7
      %p54 = por %p52, %p53
      %p55 = scmp.ne.s32.totalorder %s47, %s50
      %p56 = scmp.eq.s32.totalorder %s23, 0
      %p57 = por %p55, %p56
      %p58 = scmp.ne.s32.totalorder %s47, %s50
      %p59 = scmp.eq.s32.totalorder %s28, 7
      %p60 = por %p58, %p59
      %p61 = scmp.ne.s32.totalorder %s50, %s51
      %p62 = scmp.eq.s32.totalorder %s28, 0
      %p63 = por %p61, %p62
      %p64 = scmp.ne.s32.totalorder %s50, %s51
      %p65 = scmp.eq.s32.totalorder %s29, 7
      %p66 = por %p64, %p65
      %p68 = scmp.ne.s32.totalorder %s51, %s67
      %p69 = scmp.eq.s32.totalorder %s29, 0
      %p70 = por %p68, %p69
      %s71 = sadd.s32 %s31, 1
      %p72 = scmp.lt.s32.totalorder %s71, 3
      %s73 = scalar_select %p72, %s71, 3
      %s74 = sadd.s32 %s38, 1
      %p75 = scmp.lt.s32.totalorder %s74, 3
      %s76 = scalar_select %p75, %s74, 3
      %s77 = ssub.s32 %s30, %s42
      %s78 = ssub.s32 %s73, %s76
      %s79 = sor.u32 %s77, %s78
      %p80 = scmp.eq.s32.totalorder %s79, 0
      %s82 = sadd.s32 %s81, 1
      %s83 = scalar_select %p80, %s81, %s82
      %p86 = pneg %p80
      %p87 = scmp.eq.s32.totalorder %s23, 7
      %p88 = por %p86, %p87
      %p89 = scmp.ne.s32.totalorder %s81, %s84
      %p90 = scmp.eq.s32.totalorder %s23, 0
      %p91 = por %p89, %p90
      %p92 = scmp.ne.s32.totalorder %s81, %s84
      %p93 = scmp.eq.s32.totalorder %s28, 7
      %p94 = por %p92, %p93
      %p95 = scmp.ne.s32.totalorder %s84, %s85
      %p96 = scmp.eq.s32.totalorder %s28, 0
      %p97 = por %p95, %p96
      %p98 = scmp.ne.s32.totalorder %s84, %s85
      %p99 = scmp.eq.s32.totalorder %s29, 7
      %p100 = por %p98, %p99
      %p102 = scmp.ne.s32.totalorder %s85, %s101
      %p103 = scmp.eq.s32.totalorder %s29, 0
      %p104 = por %p102, %p103
      %s106 = sadd.s32 %s105, 1
      %p109 = scmp.eq.s32.totalorder %s23, 7
      %p110 = scmp.ne.s32.totalorder %s105, %s107
      %p111 = scmp.eq.s32.totalorder %s23, 0
      %p112 = por %p110, %p111
      %p113 = scmp.ne.s32.totalorder %s105, %s107
      %p114 = scmp.eq.s32.totalorder %s28, 7
      %p115 = por %p113, %p114
      %p116 = scmp.ne.s32.totalorder %s107, %s108
      %p117 = scmp.eq.s32.totalorder %s28, 0
      %p118 = por %p116, %p117
      %p119 = scmp.ne.s32.totalorder %s107, %s108
      %p120 = scmp.eq.s32.totalorder %s29, 7
      %p121 = por %p119, %p120
      %p123 = scmp.ne.s32.totalorder %s108, %s122
      %p124 = scmp.eq.s32.totalorder %s29, 0
      %p125 = por %p123, %p124
      %s127 = sadd.s32 %s126, 1
      %p130 = scmp.eq.s32.totalorder %s23, 7
      %p131 = scmp.ne.s32.totalorder %s126, %s128
      %p132 = scmp.eq.s32.totalorder %s23, 0
      %p133 = por %p131, %p132
      %p134 = scmp.ne.s32.totalorder %s126, %s128
      %p135 = scmp.eq.s32.totalorder %s28, 7
      %p136 = por %p134, %p135
      %p137 = scmp.ne.s32.totalorder %s128, %s129
      %p138 = scmp.eq.s32.totalorder %s28, 0
      %p139 = por %p137, %p138
      %p140 = scmp.ne.s32.totalorder %s128, %s129
      %p141 = scmp.eq.s32.totalorder %s29, 7
      %p142 = por %p140, %p141
      %p144 = scmp.ne.s32.totalorder %s129, %s143
      %p145 = scmp.eq.s32.totalorder %s29, 0
      %p146 = por %p144, %p145
      %s148 = sadd.s32 %s147, 1
      %p151 = scmp.eq.s32.totalorder %s23, 7
      %p152 = scmp.ne.s32.totalorder %s147, %s149
      %p153 = scmp.eq.s32.totalorder %s23, 0
      %p154 = por %p152, %p153
      %p155 = scmp.ne.s32.totalorder %s147, %s149
      %p156 = scmp.eq.s32.totalorder %s28, 7
      %p157 = por %p155, %p156
      %p158 = scmp.ne.s32.totalorder %s149, %s150
      %p159 = scmp.eq.s32.totalorder %s28, 0
      %p160 = por %p158, %p159
      %p161 = scmp.ne.s32.totalorder %s149, %s150
      %p162 = scmp.eq.s32.totalorder %s29, 7
      %p163 = por %p161, %p162
      %p165 = scmp.ne.s32.totalorder %s150, %s164
      %p166 = scmp.eq.s32.totalorder %s29, 0
      %p167 = por %p165, %p166
      %s169 = sadd.s32 %s168, 1
      %p172 = scmp.eq.s32.totalorder %s23, 7
      %p173 = scmp.ne.s32.totalorder %s168, %s170
      %p174 = scmp.eq.s32.totalorder %s23, 0
      %p175 = por %p173, %p174
      %p176 = scmp.ne.s32.totalorder %s168, %s170
      %p177 = scmp.eq.s32.totalorder %s28, 7
      %p178 = por %p176, %p177
      %p179 = scmp.ne.s32.totalorder %s170, %s171
      %p180 = scmp.eq.s32.totalorder %s28, 0
      %p181 = por %p179, %p180
      %p182 = scmp.ne.s32.totalorder %s170, %s171
      %p183 = scmp.eq.s32.totalorder %s29, 7
      %p184 = por %p182, %p183
      %p186 = scmp.ne.s32.totalorder %s171, %s185
      %p187 = scmp.eq.s32.totalorder %s29, 0
      %p188 = por %p186, %p187
      %s189 = ssub.s32 %s30, %s42
      %s190 = ssub.s32 %s31, %s38
      %s191 = sor.u32 %s189, %s190
      %p192 = scmp.eq.s32.totalorder %s191, 0
      %s194 = sadd.s32 %s193, 1
      %s195 = scalar_select %p192, %s193, %s194
      %p198 = pneg %p192
      %p199 = scmp.eq.s32.totalorder %s23, 7
      %p200 = por %p198, %p199
      %p201 = scmp.ne.s32.totalorder %s193, %s196
      %p202 = scmp.eq.s32.totalorder %s23, 0
      %p203 = por %p201, %p202
      %p204 = scmp.ne.s32.totalorder %s193, %s196
      %p205 = scmp.eq.s32.totalorder %s28, 7
      %p206 = por %p204, %p205
      %p207 = scmp.ne.s32.totalorder %s196, %s197
      %p208 = scmp.eq.s32.totalorder %s28, 0
      %p209 = por %p207, %p208
      %p210 = scmp.ne.s32.totalorder %s196, %s197
      %p211 = scmp.eq.s32.totalorder %s29, 7
      %p212 = por %p210, %p211
      %p214 = scmp.ne.s32.totalorder %s197, %s213
      %p215 = scmp.eq.s32.totalorder %s29, 0
      %p216 = por %p214, %p215
      %p217 = scmp.le.s32.totalorder 1, %s23
      %p218 = scmp.lt.s32.totalorder %s23, 9
      %p219 = pnand %p217, %p218
      %p220 = pneg %p219
      // Predicated region
      $region9: #{tpu_custom_call.1} parent=5 // pred_check
        _
      $region10: #{tpu_custom_call.1} parent=5 // pred_check_branch
        %222 = sbr.rel (%p219) target = $region12
      $region11: #{tpu_custom_call.1} parent=5 // pred_region
        %s223 = ssub.s32 %s23, 1
        // Predicated region
        $region13: #{tpu_custom_call.1} parent=11 // pred_check
          %p224 = pneg %p118
        $region14: #{tpu_custom_call.1} parent=11 // pred_check_branch
          %226 = sbr.rel (%p224) target = $region16
        $region15: #{tpu_custom_call.1} parent=11 // pred_region
          %s228 = ssub.s32 1536, 1536
          %229 = vsyncadd [#allocation8], %s228
          %s230 = sshll.u32 [#allocation9], 4
          %s231 = int_to_ptr.vmem [resolvable:$true] %s230
          %236 = dma.hbm_to_vmem [thread:$0]  %s2, 1536, %s231, [#allocation8], 128, 128, 8
        $region16: #{tpu_custom_call.1} parent=11 // pred_fallthru
          _
        // Predicated region
        $region17: #{tpu_custom_call.1} parent=11 // pred_check
          %p237 = pneg %p139
        $region18: #{tpu_custom_call.1} parent=11 // pred_check_branch
          %239 = sbr.rel (%p237) target = $region20
        $region19: #{tpu_custom_call.1} parent=11 // pred_region
          %s241 = ssub.s32 16, 16
          %242 = vsyncadd [#allocation11], %s241
          %s244 = sshll.u32 [#allocation10], 4
          %s245 = int_to_ptr.vmem [resolvable:$true] %s244
          %247 = dma.hbm_to_vmem [thread:$0]  %s3, 16, %s245, [#allocation11]
        $region20: #{tpu_custom_call.1} parent=11 // pred_fallthru
          _
        // Predicated region
        $region21: #{tpu_custom_call.1} parent=11 // pred_check
          %p248 = pneg %p160
        $region22: #{tpu_custom_call.1} parent=11 // pred_check_branch
          %250 = sbr.rel (%p248) target = $region24
        $region23: #{tpu_custom_call.1} parent=11 // pred_region
          %s252 = ssub.s32 16, 16
          %253 = vsyncadd [#allocation11], %s252
          %s255 = sshll.u32 [#allocation12], 4
          %s256 = int_to_ptr.vmem [resolvable:$true] %s255
          %258 = dma.hbm_to_vmem [thread:$0]  %s4, 16, %s256, [#allocation11]
        $region24: #{tpu_custom_call.1} parent=11 // pred_fallthru
          _
        // Predicated region
        $region25: #{tpu_custom_call.1} parent=11 // pred_check
          %p259 = pneg %p181
        $region26: #{tpu_custom_call.1} parent=11 // pred_check_branch
          %261 = sbr.rel (%p259) target = $region28
        $region27: #{tpu_custom_call.1} parent=11 // pred_region
          %s263 = ssub.s32 16, 16
          %264 = vsyncadd [#allocation14], %s263
          %s266 = sshll.u32 [#allocation13], 4
          %s267 = int_to_ptr.vmem [resolvable:$true] %s266
          %269 = dma.hbm_to_vmem [thread:$0]  %s5, 16, %s267, [#allocation14]
        $region28: #{tpu_custom_call.1} parent=11 // pred_fallthru
          _
      $region12: #{tpu_custom_call.1} parent=5 // pred_fallthru
        _
      %p270 = scmp.lt.s32.totalorder %s23, 8
      // Predicated region
      $region29: #{tpu_custom_call.1} parent=5 // pred_check
        %p271 = pneg %p270
      $region30: #{tpu_custom_call.1} parent=5 // pred_check_branch
        %273 = sbr.rel (%p271) target = $region32
      $region31: #{tpu_custom_call.1} parent=5 // pred_region
        // Predicated region
        $region33: #{tpu_custom_call.1} parent=31 // pred_check
          %p274 = pneg %p57
        $region34: #{tpu_custom_call.1} parent=31 // pred_check_branch
          %276 = sbr.rel (%p274) target = $region36
        $region35: #{tpu_custom_call.1} parent=31 // pred_region
          %s277 = sand.u32 %s47, 1
          %s278 = scalar_lea.sflag [#allocation5], %s277
          %s279 = sand.u32 %s47, 1
          %s280 = smul.addr %s279, 8
          %s281 = scalar_lea.vmem [#allocation4], %s280
          %s283 = ssub.s32 128, 128
          %284 = vsyncadd %s278, %s283
          %s285 = smul.addr %s30, 4
          %s286 = sadd.s32 %s31, %s285
          %s287 = smul.addr %s286, 128
          %s288 = scalar_lea.hbm %s0, %s287
          %s290 = sshll.u32 %s281, 4
          %s291 = int_to_ptr.vmem [resolvable:$true] %s290
          %293 = dma.hbm_to_vmem [thread:$0]  %s288, 128, %s291, %s278
        $region36: #{tpu_custom_call.1} parent=31 // pred_fallthru
          _
        // Predicated region
        $region37: #{tpu_custom_call.1} parent=31 // pred_check
          %p294 = pneg %p91
        $region38: #{tpu_custom_call.1} parent=31 // pred_check_branch
          %296 = sbr.rel (%p294) target = $region40
        $region39: #{tpu_custom_call.1} parent=31 // pred_region
          %s297 = sand.u32 %s23, 1
          %s298 = scalar_lea.sflag [#allocation8], %s297
          %s299 = sand.u32 %s81, 1
          %s300 = smul.addr %s299, 8
          %s301 = scalar_lea.vmem [#allocation7], %s300
          %s302 = sadd.s32 %s31, 1
          %p303 = scmp.lt.s32.totalorder %s302, 3
          %s304 = scalar_select %p303, %s302, 3
          %s306 = ssub.s32 128, 128
          %307 = vsyncadd %s298, %s306
          %s308 = smul.addr %s30, 4
          %s309 = sadd.s32 %s304, %s308
          %s310 = smul.addr %s309, 128
          %s311 = scalar_lea.hbm %s1, %s310
          %s313 = sshll.u32 %s301, 4
          %s314 = int_to_ptr.vmem [resolvable:$true] %s313
          %316 = dma.hbm_to_vmem [thread:$0]  %s311, 128, %s314, %s298
        $region40: #{tpu_custom_call.1} parent=31 // pred_fallthru
          _
      $region32: #{tpu_custom_call.1} parent=5 // pred_fallthru
        _
      %p317 = scmp.le.s32.totalorder 1, %s23
      %p318 = scmp.lt.s32.totalorder %s23, 9
      %p319 = pnand %p317, %p318
      %p320 = pneg %p319
      // Predicated region
      $region41: #{tpu_custom_call.1} parent=5 // pred_check
        _
      $region42: #{tpu_custom_call.1} parent=5 // pred_check_branch
        %322 = sbr.rel (%p319) target = $region44
      $region43: #{tpu_custom_call.1} parent=5 // pred_region
        %s323 = ssub.s32 %s23, 1
        %s324 = sand.u32 %s50, 1
        %s325 = scalar_lea.sflag [#allocation5], %s324
        %s326 = sand.u32 %s50, 1
        %s327 = smul.addr %s326, 8
        %s328 = scalar_lea.vmem [#allocation4], %s327
        // Predicated region
        $region45: #{tpu_custom_call.1} parent=43 // pred_check
          %p329 = pneg %p63
        $region46: #{tpu_custom_call.1} parent=43 // pred_check_branch
          %331 = sbr.rel (%p329) target = $region48
        $region47: #{tpu_custom_call.1} parent=43 // pred_region
          %332 = dma.done %s325, 128
        $region48: #{tpu_custom_call.1} parent=43 // pred_fallthru
          _
        %s333 = sand.u32 %s28, 1
        %s334 = scalar_lea.sflag [#allocation8], %s333
        %s335 = sand.u32 %s84, 1
        %s336 = smul.addr %s335, 8
        %s337 = scalar_lea.vmem [#allocation7], %s336
        // Predicated region
        $region49: #{tpu_custom_call.1} parent=43 // pred_check
          %p338 = pneg %p97
        $region50: #{tpu_custom_call.1} parent=43 // pred_check_branch
          %340 = sbr.rel (%p338) target = $region52
        $region51: #{tpu_custom_call.1} parent=43 // pred_region
          %341 = dma.done %s334, 128
        $region52: #{tpu_custom_call.1} parent=43 // pred_fallthru
          _
        // Predicated region
        $region53: #{tpu_custom_call.1} parent=43 // pred_check
          %p342 = pneg %p118
        $region54: #{tpu_custom_call.1} parent=43 // pred_check_branch
          %344 = sbr.rel (%p342) target = $region56
        $region55: #{tpu_custom_call.1} parent=43 // pred_region
          %345 = dma.done [#allocation8], 1536
        $region56: #{tpu_custom_call.1} parent=43 // pred_fallthru
          _
        // Predicated region
        $region57: #{tpu_custom_call.1} parent=43 // pred_check
          %p346 = pneg %p139
        $region58: #{tpu_custom_call.1} parent=43 // pred_check_branch
          %348 = sbr.rel (%p346) target = $region60
        $region59: #{tpu_custom_call.1} parent=43 // pred_region
          %349 = dma.done [#allocation11], 16
        $region60: #{tpu_custom_call.1} parent=43 // pred_fallthru
          _
        // Predicated region
        $region61: #{tpu_custom_call.1} parent=43 // pred_check
          %p350 = pneg %p160
        $region62: #{tpu_custom_call.1} parent=43 // pred_check_branch
          %352 = sbr.rel (%p350) target = $region64
        $region63: #{tpu_custom_call.1} parent=43 // pred_region
          %353 = dma.done [#allocation11], 16
        $region64: #{tpu_custom_call.1} parent=43 // pred_fallthru
          _
        // Predicated region
        $region65: #{tpu_custom_call.1} parent=43 // pred_check
          %p354 = pneg %p181
        $region66: #{tpu_custom_call.1} parent=43 // pred_check_branch
          %356 = sbr.rel (%p354) target = $region68
        $region67: #{tpu_custom_call.1} parent=43 // pred_region
          %357 = dma.done [#allocation14], 16
        $region68: #{tpu_custom_call.1} parent=43 // pred_fallthru
          _
        %s358 = sand.u32 %s50, 1
        %s359 = scalar_lea.sflag [#allocation5], %s358
        %s360 = sand.u32 %s50, 1
        %s361 = smul.addr %s360, 8
        %s362 = scalar_lea.vmem [#allocation4], %s361
        %p363 = pneg %p63
        %p364 = pneg %p60
        %s365 = sand.u32 %s28, 1
        %s366 = scalar_lea.sflag [#allocation8], %s365
        %s367 = sand.u32 %s84, 1
        %s368 = smul.addr %s367, 8
        %s369 = scalar_lea.vmem [#allocation7], %s368
        %p370 = pneg %p97
        %p371 = pneg %p94
        %p372 = pneg %p118
        %p373 = pneg %p115
        %p374 = pneg %p139
        %p375 = pneg %p136
        %p376 = pneg %p160
        %p377 = pneg %p157
        %p378 = pneg %p181
        %p379 = pneg %p178
        %p380 = pneg %p209
        %p381 = pneg %p206
        %s382 = sand.u32 %s196, 1
        %s383 = scalar_lea.sflag [#allocation6], %s382
        %s384 = sand.u32 %s196, 1
        %s385 = smul.addr %s384, 8
        %s386 = scalar_lea.vmem [#allocation15], %s385
        %s387 = sadd.s32 %s33, 1
        %p388 = scmp.lt.s32.totalorder %s387, 3
        %s389 = scalar_select %p388, %s387, 3
        %v390 = vld [vmem:[%s328] sm:$0xff]
        %vm391 = vcmask 261120
        %392 = vst.msk [vmem:[#allocation2] sm:$0xff] %vm391, %v390
        %v393 = vld [vmem:[%s337] sm:$0xff]
        %394 = vst.msk [vmem:[#allocation2 + $0x8] sm:$0xff] %vm391, %v393
        %v395 = vld [vmem:[#allocation10] sm:$0x1]
        %v397 = vlaneseq
        %v398 = vshrl.u32 %v397, 7
        %v399 = vsub.s32 0, %v398
        %v400 = vrot.slane %v395, %v399
        %402 = vst.msk [vmem:[#allocation3] sm:$0xff] %vm391, %v400
        %v403 = vld [vmem:[#allocation2] sm:$0xff]
        %v404 = vld [vmem:[#allocation3] sm:$0xff]
        %v405 = vld [vmem:[#allocation9] sm:$0xff]
        %v406 = vld [vmem:[#allocation9 + $0x8] sm:$0xff]
        %vm407 = vcmask 130048
        %v409 = vsel %vm407, %v403, 0
        %411 = vmatprep.subr.mxu0 0.0
        %412 = vmatpush1.msra.mxu0 %v405
        %413 = vmatprep.subr.mxu0 0.0
        %414 = vmatpush1.msra.mxu0 %v406
        %415 = vmatprep.subr.mxu0 0.0
        %416 = vmatpush1.msra.mxu0 0.0
        %417 = vmatprep.subr.mxu0 0.0
        %418 = vmatpush1.msra.mxu0 0.0
        %419 = vmatprep.subr.mxu0 0.0
        %420 = vmatpush1.msra.mxu0 0.0
        %421 = vmatprep.subr.mxu0 0.0
        %422 = vmatpush1.msra.mxu0 0.0
        %423 = vmatprep.subr.mxu0 0.0
        %424 = vmatpush1.msra.mxu0 0.0
        %425 = vmatprep.subr.mxu0 0.0
        %426 = vmatpush1.msra.mxu0 0.0
        %427 = vmatprep.subr.mxu0 0.0
        %428 = vmatpush1.msra.mxu0 0.0
        %429 = vmatprep.subr.mxu0 0.0
        %430 = vmatpush1.msra.mxu0 0.0
        %431 = vmatprep.subr.mxu0 0.0
        %432 = vmatpush1.msra.mxu0 0.0
        %433 = vmatprep.subr.mxu0 0.0
        %434 = vmatpush1.msra.mxu0 0.0
        %435 = vmatprep.subr.mxu0 0.0
        %436 = vmatpush1.msra.mxu0 0.0
        %437 = vmatprep.subr.mxu0 0.0
        %438 = vmatpush1.msra.mxu0 0.0
        %439 = vmatprep.subr.mxu0 0.0
        %440 = vmatpush1.msra.mxu0 0.0
        %441 = vmatprep.subr.mxu0 0.0
        %442 = vmatpush1.msra.mxu0 0.0
        %443 = vmatprep.subr.mxu0 0.0
        %444 = vmatpush1.msra.mxu0 0.0
        %445 = vmatprep.subr.mxu0 0.0
        %446 = vmatpush1.msra.mxu0 0.0
        %447 = vmatprep.subr.mxu0 0.0
        %448 = vmatpush1.msra.mxu0 0.0
        %449 = vmatprep.subr.mxu0 0.0
        %450 = vmatpush1.msra.mxu0 0.0
        %451 = vmatprep.subr.mxu0 0.0
        %452 = vmatpush1.msra.mxu0 0.0
        %453 = vmatprep.subr.mxu0 0.0
        %454 = vmatpush1.msra.mxu0 0.0
        %455 = vmatprep.subr.mxu0 0.0
        %456 = vmatpush1.msra.mxu0 0.0
        %457 = vmatprep.subr.mxu0 0.0
        %458 = vmatpush1.msra.mxu0 0.0
        %459 = vmatprep.subr.mxu0 0.0
        %460 = vmatpush1.msra.mxu0 0.0
        %461 = vmatprep.subr.mxu0 0.0
        %462 = vmatpush1.msra.mxu0 0.0
        %463 = vmatprep.subr.mxu0 0.0
        %464 = vmatpush1.msra.mxu0 0.0
        %465 = vmatprep.subr.mxu0 0.0
        %466 = vmatpush1.msra.mxu0 0.0
        %467 = vmatprep.subr.mxu0 0.0
        %468 = vmatpush1.msra.mxu0 0.0
        %469 = vmatprep.subr.mxu0 0.0
        %470 = vmatpush1.msra.mxu0 0.0
        %471 = vmatprep.subr.mxu0 0.0
        %472 = vmatpush1.msra.mxu0 0.0
        %473 = vmatprep.subr.mxu0 0.0
        %474 = vmatpush1.msra.mxu0 0.0
        %475 = vmatprep.mubr.f32.mxu0 0.0
        %476 = vmatmul.mubr.f32.gmra.mrb[0].mxu0 %v409
        %v477 = vpop.f32.mrb[0].mxu0
        %v478 = vadd.f32 0.0, %v477
        %v479 = vpop.f32.mrb[0].mxu0
        %480 = vdwg.mxu0
        %v481 = vadd.f32 %v404, %v478
        %482 = vst.msk [vmem:[#allocation3] sm:$0xff] %vm407, %v481
        %v483 = vld [vmem:[#allocation3] sm:$0xff]
        %s484 = scalar_lea.vmem [#allocation9], 16
        %v485 = vld [vmem:[%s484] sm:$0xff]
        %v486 = vld [vmem:[%s484 + $0x8] sm:$0xff]
        %487 = vrot.lane.b32.xlu0 %v403, 112
        %v488 = vpop.permute.xlu0 %487
        %v489 = vsel %vm407, %v488, 0
        %491 = vmatprep.subr.mxu0 0.0
        %492 = vmatpush1.msra.mxu0 %v485
        %493 = vmatprep.subr.mxu0 0.0
        %494 = vmatpush1.msra.mxu0 %v486
        %495 = vmatprep.subr.mxu0 0.0
        %496 = vmatpush1.msra.mxu0 0.0
        %497 = vmatprep.subr.mxu0 0.0
        %498 = vmatpush1.msra.mxu0 0.0
        %499 = vmatprep.subr.mxu0 0.0
        %500 = vmatpush1.msra.mxu0 0.0
        %501 = vmatprep.subr.mxu0 0.0
        %502 = vmatpush1.msra.mxu0 0.0
        %503 = vmatprep.subr.mxu0 0.0
        %504 = vmatpush1.msra.mxu0 0.0
        %505 = vmatprep.subr.mxu0 0.0
        %506 = vmatpush1.msra.mxu0 0.0
        %507 = vmatprep.subr.mxu0 0.0
        %508 = vmatpush1.msra.mxu0 0.0
        %509 = vmatprep.subr.mxu0 0.0
        %510 = vmatpush1.msra.mxu0 0.0
        %511 = vmatprep.subr.mxu0 0.0
        %512 = vmatpush1.msra.mxu0 0.0
        %513 = vmatprep.subr.mxu0 0.0
        %514 = vmatpush1.msra.mxu0 0.0
        %515 = vmatprep.subr.mxu0 0.0
        %516 = vmatpush1.msra.mxu0 0.0
        %517 = vmatprep.subr.mxu0 0.0
        %518 = vmatpush1.msra.mxu0 0.0
        %519 = vmatprep.subr.mxu0 0.0
        %520 = vmatpush1.msra.mxu0 0.0
        %521 = vmatprep.subr.mxu0 0.0
        %522 = vmatpush1.msra.mxu0 0.0
        %523 = vmatprep.subr.mxu0 0.0
        %524 = vmatpush1.msra.mxu0 0.0
        %525 = vmatprep.subr.mxu0 0.0
        %526 = vmatpush1.msra.mxu0 0.0
        %527 = vmatprep.subr.mxu0 0.0
        %528 = vmatpush1.msra.mxu0 0.0
        %529 = vmatprep.subr.mxu0 0.0
        %530 = vmatpush1.msra.mxu0 0.0
        %531 = vmatprep.subr.mxu0 0.0
        %532 = vmatpush1.msra.mxu0 0.0
        %533 = vmatprep.subr.mxu0 0.0
        %534 = vmatpush1.msra.mxu0 0.0
        %535 = vmatprep.subr.mxu0 0.0
        %536 = vmatpush1.msra.mxu0 0.0
        %537 = vmatprep.subr.mxu0 0.0
        %538 = vmatpush1.msra.mxu0 0.0
        %539 = vmatprep.subr.mxu0 0.0
        %540 = vmatpush1.msra.mxu0 0.0
        %541 = vmatprep.subr.mxu0 0.0
        %542 = vmatpush1.msra.mxu0 0.0
        %543 = vmatprep.subr.mxu0 0.0
        %544 = vmatpush1.msra.mxu0 0.0
        %545 = vmatprep.subr.mxu0 0.0
        %546 = vmatpush1.msra.mxu0 0.0
        %547 = vmatprep.subr.mxu0 0.0
        %548 = vmatpush1.msra.mxu0 0.0
        %549 = vmatprep.subr.mxu0 0.0
        %550 = vmatpush1.msra.mxu0 0.0
        %551 = vmatprep.subr.mxu0 0.0
        %552 = vmatpush1.msra.mxu0 0.0
        %553 = vmatprep.subr.mxu0 0.0
        %554 = vmatpush1.msra.mxu0 0.0
        %555 = vmatprep.mubr.f32.mxu0 0.0
        %556 = vmatmul.mubr.f32.gmra.mrb[0].mxu0 %v489
        %v557 = vpop.f32.mrb[0].mxu0
        %v558 = vadd.f32 0.0, %v557
        %v559 = vpop.f32.mrb[0].mxu0
        %560 = vdwg.mxu0
        %562 = vrot.lane.b32.xlu0 %v558, 16
        %v563 = vpop.permute.xlu0 %562
        %v565 = vadd.f32 %v483, %v563
        %vm566 = vcmask 261248
        %567 = vst.msk [vmem:[#allocation3] sm:$0xff] %vm566, %v565
        %v568 = vld [vmem:[#allocation2 + $0x1] sm:$0xff]
        %v569 = vld [vmem:[#allocation3] sm:$0xff]
        %s570 = scalar_lea.vmem [#allocation9], 32
        %v571 = vld [vmem:[%s570] sm:$0xff]
        %v572 = vld [vmem:[%s570 + $0x8] sm:$0xff]
        %v574 = vsel %vm407, %v568, 0
        %576 = vmatprep.subr.mxu0 0.0
        %577 = vmatpush1.msra.mxu0 %v571
        %578 = vmatprep.subr.mxu0 0.0
        %579 = vmatpush1.msra.mxu0 %v572
        %580 = vmatprep.subr.mxu0 0.0
        %581 = vmatpush1.msra.mxu0 0.0
        %582 = vmatprep.subr.mxu0 0.0
        %583 = vmatpush1.msra.mxu0 0.0
        %584 = vmatprep.subr.mxu0 0.0
        %585 = vmatpush1.msra.mxu0 0.0
        %586 = vmatprep.subr.mxu0 0.0
        %587 = vmatpush1.msra.mxu0 0.0
        %588 = vmatprep.subr.mxu0 0.0
        %589 = vmatpush1.msra.mxu0 0.0
        %590 = vmatprep.subr.mxu0 0.0
        %591 = vmatpush1.msra.mxu0 0.0
        %592 = vmatprep.subr.mxu0 0.0
        %593 = vmatpush1.msra.mxu0 0.0
        %594 = vmatprep.subr.mxu0 0.0
        %595 = vmatpush1.msra.mxu0 0.0
        %596 = vmatprep.subr.mxu0 0.0
        %597 = vmatpush1.msra.mxu0 0.0
        %598 = vmatprep.subr.mxu0 0.0
        %599 = vmatpush1.msra.mxu0 0.0
        %600 = vmatprep.subr.mxu0 0.0
        %601 = vmatpush1.msra.mxu0 0.0
        %602 = vmatprep.subr.mxu0 0.0
        %603 = vmatpush1.msra.mxu0 0.0
        %604 = vmatprep.subr.mxu0 0.0
        %605 = vmatpush1.msra.mxu0 0.0
        %606 = vmatprep.subr.mxu0 0.0
        %607 = vmatpush1.msra.mxu0 0.0
        %608 = vmatprep.subr.mxu0 0.0
        %609 = vmatpush1.msra.mxu0 0.0
        %610 = vmatprep.subr.mxu0 0.0
        %611 = vmatpush1.msra.mxu0 0.0
        %612 = vmatprep.subr.mxu0 0.0
        %613 = vmatpush1.msra.mxu0 0.0
        %614 = vmatprep.subr.mxu0 0.0
        %615 = vmatpush1.msra.mxu0 0.0
        %616 = vmatprep.subr.mxu0 0.0
        %617 = vmatpush1.msra.mxu0 0.0
        %618 = vmatprep.subr.mxu0 0.0
        %619 = vmatpush1.msra.mxu0 0.0
        %620 = vmatprep.subr.mxu0 0.0
        %621 = vmatpush1.msra.mxu0 0.0
        %622 = vmatprep.subr.mxu0 0.0
        %623 = vmatpush1.msra.mxu0 0.0
        %624 = vmatprep.subr.mxu0 0.0
        %625 = vmatpush1.msra.mxu0 0.0
        %626 = vmatprep.subr.mxu0 0.0
        %627 = vmatpush1.msra.mxu0 0.0
        %628 = vmatprep.subr.mxu0 0.0
        %629 = vmatpush1.msra.mxu0 0.0
        %630 = vmatprep.subr.mxu0 0.0
        %631 = vmatpush1.msra.mxu0 0.0
        %632 = vmatprep.subr.mxu0 0.0
        %633 = vmatpush1.msra.mxu0 0.0
        %634 = vmatprep.subr.mxu0 0.0
        %635 = vmatpush1.msra.mxu0 0.0
        %636 = vmatprep.subr.mxu0 0.0
        %637 = vmatpush1.msra.mxu0 0.0
        %638 = vmatprep.subr.mxu0 0.0
        %639 = vmatpush1.msra.mxu0 0.0
        %640 = vmatprep.mubr.f32.mxu0 0.0
        %641 = vmatmul.mubr.f32.gmra.mrb[0].mxu0 %v574
        %v642 = vpop.f32.mrb[0].mxu0
        %v643 = vadd.f32 0.0, %v642
        %v644 = vpop.f32.mrb[0].mxu0
        %645 = vdwg.mxu0
        %v646 = vadd.f32 %v569, %v643
        %647 = vst.msk [vmem:[#allocation3] sm:$0xff] %vm407, %v646
        %v648 = vld [vmem:[#allocation3] sm:$0xff]
        %s649 = scalar_lea.vmem [#allocation9], 48
        %v650 = vld [vmem:[%s649] sm:$0xff]
        %v651 = vld [vmem:[%s649 + $0x8] sm:$0xff]
        %652 = vrot.lane.b32.xlu0 %v568, 112
        %v653 = vpop.permute.xlu0 %652
        %v654 = vsel %vm407, %v653, 0
        %656 = vmatprep.subr.mxu0 0.0
        %657 = vmatpush1.msra.mxu0 %v650
        %658 = vmatprep.subr.mxu0 0.0
        %659 = vmatpush1.msra.mxu0 %v651
        %660 = vmatprep.subr.mxu0 0.0
        %661 = vmatpush1.msra.mxu0 0.0
        %662 = vmatprep.subr.mxu0 0.0
        %663 = vmatpush1.msra.mxu0 0.0
        %664 = vmatprep.subr.mxu0 0.0
        %665 = vmatpush1.msra.mxu0 0.0
        %666 = vmatprep.subr.mxu0 0.0
        %667 = vmatpush1.msra.mxu0 0.0
        %668 = vmatprep.subr.mxu0 0.0
        %669 = vmatpush1.msra.mxu0 0.0
        %670 = vmatprep.subr.mxu0 0.0
        %671 = vmatpush1.msra.mxu0 0.0
        %672 = vmatprep.subr.mxu0 0.0
        %673 = vmatpush1.msra.mxu0 0.0
        %674 = vmatprep.subr.mxu0 0.0
        %675 = vmatpush1.msra.mxu0 0.0
        %676 = vmatprep.subr.mxu0 0.0
        %677 = vmatpush1.msra.mxu0 0.0
        %678 = vmatprep.subr.mxu0 0.0
        %679 = vmatpush1.msra.mxu0 0.0
        %680 = vmatprep.subr.mxu0 0.0
        %681 = vmatpush1.msra.mxu0 0.0
        %682 = vmatprep.subr.mxu0 0.0
        %683 = vmatpush1.msra.mxu0 0.0
        %684 = vmatprep.subr.mxu0 0.0
        %685 = vmatpush1.msra.mxu0 0.0
        %686 = vmatprep.subr.mxu0 0.0
        %687 = vmatpush1.msra.mxu0 0.0
        %688 = vmatprep.subr.mxu0 0.0
        %689 = vmatpush1.msra.mxu0 0.0
        %690 = vmatprep.subr.mxu0 0.0
        %691 = vmatpush1.msra.mxu0 0.0
        %692 = vmatprep.subr.mxu0 0.0
        %693 = vmatpush1.msra.mxu0 0.0
        %694 = vmatprep.subr.mxu0 0.0
        %695 = vmatpush1.msra.mxu0 0.0
        %696 = vmatprep.subr.mxu0 0.0
        %697 = vmatpush1.msra.mxu0 0.0
        %698 = vmatprep.subr.mxu0 0.0
        %699 = vmatpush1.msra.mxu0 0.0
        %700 = vmatprep.subr.mxu0 0.0
        %701 = vmatpush1.msra.mxu0 0.0
        %702 = vmatprep.subr.mxu0 0.0
        %703 = vmatpush1.msra.mxu0 0.0
        %704 = vmatprep.subr.mxu0 0.0
        %705 = vmatpush1.msra.mxu0 0.0
        %706 = vmatprep.subr.mxu0 0.0
        %707 = vmatpush1.msra.mxu0 0.0
        %708 = vmatprep.subr.mxu0 0.0
        %709 = vmatpush1.msra.mxu0 0.0
        %710 = vmatprep.subr.mxu0 0.0
        %711 = vmatpush1.msra.mxu0 0.0
        %712 = vmatprep.subr.mxu0 0.0
        %713 = vmatpush1.msra.mxu0 0.0
        %714 = vmatprep.subr.mxu0 0.0
        %715 = vmatpush1.msra.mxu0 0.0
        %716 = vmatprep.subr.mxu0 0.0
        %717 = vmatpush1.msra.mxu0 0.0
        %718 = vmatprep.subr.mxu0 0.0
        %719 = vmatpush1.msra.mxu0 0.0
        %720 = vmatprep.mubr.f32.mxu0 0.0
        %721 = vmatmul.mubr.f32.gmra.mrb[0].mxu0 %v654
        %v722 = vpop.f32.mrb[0].mxu0
        %v723 = vadd.f32 0.0, %v722
        %v724 = vpop.f32.mrb[0].mxu0
        %725 = vdwg.mxu0
        %727 = vrot.lane.b32.xlu0 %v723, 16
        %v728 = vpop.permute.xlu0 %727
        %v730 = vadd.f32 %v648, %v728
        %731 = vst.msk [vmem:[#allocation3] sm:$0xff] %vm566, %v730
        %v732 = vld [vmem:[#allocation2 + $0x2] sm:$0xff]
        %v733 = vld [vmem:[#allocation3] sm:$0xff]
        %s734 = scalar_lea.vmem [#allocation9], 64
        %v735 = vld [vmem:[%s734] sm:$0xff]
        %v736 = vld [vmem:[%s734 + $0x8] sm:$0xff]
        %v738 = vsel %vm407, %v732, 0
        %740 = vmatprep.subr.mxu0 0.0
        %741 = vmatpush1.msra.mxu0 %v735
        %742 = vmatprep.subr.mxu0 0.0
        %743 = vmatpush1.msra.mxu0 %v736
        %744 = vmatprep.subr.mxu0 0.0
        %745 = vmatpush1.msra.mxu0 0.0
        %746 = vmatprep.subr.mxu0 0.0
        %747 = vmatpush1.msra.mxu0 0.0
        %748 = vmatprep.subr.mxu0 0.0
        %749 = vmatpush1.msra.mxu0 0.0
        %750 = vmatprep.subr.mxu0 0.0
        %751 = vmatpush1.msra.mxu0 0.0
        %752 = vmatprep.subr.mxu0 0.0
        %753 = vmatpush1.msra.mxu0 0.0
        %754 = vmatprep.subr.mxu0 0.0
        %755 = vmatpush1.msra.mxu0 0.0
        %756 = vmatprep.subr.mxu0 0.0
        %757 = vmatpush1.msra.mxu0 0.0
        %758 = vmatprep.subr.mxu0 0.0
        %759 = vmatpush1.msra.mxu0 0.0
        %760 = vmatprep.subr.mxu0 0.0
        %761 = vmatpush1.msra.mxu0 0.0
        %762 = vmatprep.subr.mxu0 0.0
        %763 = vmatpush1.msra.mxu0 0.0
        %764 = vmatprep.subr.mxu0 0.0
        %765 = vmatpush1.msra.mxu0 0.0
        %766 = vmatprep.subr.mxu0 0.0
        %767 = vmatpush1.msra.mxu0 0.0
        %768 = vmatprep.subr.mxu0 0.0
        %769 = vmatpush1.msra.mxu0 0.0
        %770 = vmatprep.subr.mxu0 0.0
        %771 = vmatpush1.msra.mxu0 0.0
        %772 = vmatprep.subr.mxu0 0.0
        %773 = vmatpush1.msra.mxu0 0.0
        %774 = vmatprep.subr.mxu0 0.0
        %775 = vmatpush1.msra.mxu0 0.0
        %776 = vmatprep.subr.mxu0 0.0
        %777 = vmatpush1.msra.mxu0 0.0
        %778 = vmatprep.subr.mxu0 0.0
        %779 = vmatpush1.msra.mxu0 0.0
        %780 = vmatprep.subr.mxu0 0.0
        %781 = vmatpush1.msra.mxu0 0.0
        %782 = vmatprep.subr.mxu0 0.0
        %783 = vmatpush1.msra.mxu0 0.0
        %784 = vmatprep.subr.mxu0 0.0
        %785 = vmatpush1.msra.mxu0 0.0
        %786 = vmatprep.subr.mxu0 0.0
        %787 = vmatpush1.msra.mxu0 0.0
        %788 = vmatprep.subr.mxu0 0.0
        %789 = vmatpush1.msra.mxu0 0.0
        %790 = vmatprep.subr.mxu0 0.0
        %791 = vmatpush1.msra.mxu0 0.0
        %792 = vmatprep.subr.mxu0 0.0
        %793 = vmatpush1.msra.mxu0 0.0
        %794 = vmatprep.subr.mxu0 0.0
        %795 = vmatpush1.msra.mxu0 0.0
        %796 = vmatprep.subr.mxu0 0.0
        %797 = vmatpush1.msra.mxu0 0.0
        %798 = vmatprep.subr.mxu0 0.0
        %799 = vmatpush1.msra.mxu0 0.0
        %800 = vmatprep.subr.mxu0 0.0
        %801 = vmatpush1.msra.mxu0 0.0
        %802 = vmatprep.subr.mxu0 0.0
        %803 = vmatpush1.msra.mxu0 0.0
        %804 = vmatprep.mubr.f32.mxu0 0.0
        %805 = vmatmul.mubr.f32.gmra.mrb[0].mxu0 %v738
        %v806 = vpop.f32.mrb[0].mxu0
        %v807 = vadd.f32 0.0, %v806
        %v808 = vpop.f32.mrb[0].mxu0
        %809 = vdwg.mxu0
        %v810 = vadd.f32 %v733, %v807
        %811 = vst.msk [vmem:[#allocation3] sm:$0xff] %vm407, %v810
        %v812 = vld [vmem:[#allocation3] sm:$0xff]
        %s813 = scalar_lea.vmem [#allocation9], 80
        %v814 = vld [vmem:[%s813] sm:$0xff]
        %v815 = vld [vmem:[%s813 + $0x8] sm:$0xff]
        %816 = vrot.lane.b32.xlu0 %v732, 112
        %v817 = vpop.permute.xlu0 %816
        %v818 = vsel %vm407, %v817, 0
        %820 = vmatprep.subr.mxu0 0.0
        %821 = vmatpush1.msra.mxu0 %v814
        %822 = vmatprep.subr.mxu0 0.0
        %823 = vmatpush1.msra.mxu0 %v815
        %824 = vmatprep.subr.mxu0 0.0
        %825 = vmatpush1.msra.mxu0 0.0
        %826 = vmatprep.subr.mxu0 0.0
        %827 = vmatpush1.msra.mxu0 0.0
        %828 = vmatprep.subr.mxu0 0.0
        %829 = vmatpush1.msra.mxu0 0.0
        %830 = vmatprep.subr.mxu0 0.0
        %831 = vmatpush1.msra.mxu0 0.0
        %832 = vmatprep.subr.mxu0 0.0
        %833 = vmatpush1.msra.mxu0 0.0
        %834 = vmatprep.subr.mxu0 0.0
        %835 = vmatpush1.msra.mxu0 0.0
        %836 = vmatprep.subr.mxu0 0.0
        %837 = vmatpush1.msra.mxu0 0.0
        %838 = vmatprep.subr.mxu0 0.0
        %839 = vmatpush1.msra.mxu0 0.0
        %840 = vmatprep.subr.mxu0 0.0
        %841 = vmatpush1.msra.mxu0 0.0
        %842 = vmatprep.subr.mxu0 0.0
        %843 = vmatpush1.msra.mxu0 0.0
        %844 = vmatprep.subr.mxu0 0.0
        %845 = vmatpush1.msra.mxu0 0.0
        %846 = vmatprep.subr.mxu0 0.0
        %847 = vmatpush1.msra.mxu0 0.0
        %848 = vmatprep.subr.mxu0 0.0
        %849 = vmatpush1.msra.mxu0 0.0
        %850 = vmatprep.subr.mxu0 0.0
        %851 = vmatpush1.msra.mxu0 0.0
        %852 = vmatprep.subr.mxu0 0.0
        %853 = vmatpush1.msra.mxu0 0.0
        %854 = vmatprep.subr.mxu0 0.0
        %855 = vmatpush1.msra.mxu0 0.0
        %856 = vmatprep.subr.mxu0 0.0
        %857 = vmatpush1.msra.mxu0 0.0
        %858 = vmatprep.subr.mxu0 0.0
        %859 = vmatpush1.msra.mxu0 0.0
        %860 = vmatprep.subr.mxu0 0.0
        %861 = vmatpush1.msra.mxu0 0.0
        %862 = vmatprep.subr.mxu0 0.0
        %863 = vmatpush1.msra.mxu0 0.0
        %864 = vmatprep.subr.mxu0 0.0
        %865 = vmatpush1.msra.mxu0 0.0
        %866 = vmatprep.subr.mxu0 0.0
        %867 = vmatpush1.msra.mxu0 0.0
        %868 = vmatprep.subr.mxu0 0.0
        %869 = vmatpush1.msra.mxu0 0.0
        %870 = vmatprep.subr.mxu0 0.0
        %871 = vmatpush1.msra.mxu0 0.0
        %872 = vmatprep.subr.mxu0 0.0
        %873 = vmatpush1.msra.mxu0 0.0
        %874 = vmatprep.subr.mxu0 0.0
        %875 = vmatpush1.msra.mxu0 0.0
        %876 = vmatprep.subr.mxu0 0.0
        %877 = vmatpush1.msra.mxu0 0.0
        %878 = vmatprep.subr.mxu0 0.0
        %879 = vmatpush1.msra.mxu0 0.0
        %880 = vmatprep.subr.mxu0 0.0
        %881 = vmatpush1.msra.mxu0 0.0
        %882 = vmatprep.subr.mxu0 0.0
        %883 = vmatpush1.msra.mxu0 0.0
        %884 = vmatprep.mubr.f32.mxu0 0.0
        %885 = vmatmul.mubr.f32.gmra.mrb[0].mxu0 %v818
        %v886 = vpop.f32.mrb[0].mxu0
        %v887 = vadd.f32 0.0, %v886
        %v888 = vpop.f32.mrb[0].mxu0
        %889 = vdwg.mxu0
        %891 = vrot.lane.b32.xlu0 %v887, 16
        %v892 = vpop.permute.xlu0 %891
        %v894 = vadd.f32 %v812, %v892
        %895 = vst.msk [vmem:[#allocation3] sm:$0xff] %vm566, %v894
        %v896 = vld [vmem:[#allocation3] sm:$0xff]
        %v897 = vsel %vm391, %v896, 0.0
        %898 = vadd.xlane.f32.xlu0 %v897
        %v899 = vpop.xlane.xlu0 %898
        %v900 = vrcp.pop 32.0
        %v901 = vmul.f32 %v899, %v900
        %v902 = vsub.f32 %v896, %v901
        %v903 = vmul.f32 %v902, %v902
        %v904 = vsel %vm391, %v903, 0.0
        %905 = vadd.xlane.f32.xlu0 %v904
        %v906 = vpop.xlane.xlu0 %905
        %v907 = vmul.f32 %v906, %v900
        %v908 = vadd.f32 %v907, 1e-05
        %v909 = vrsqrt.pop %v908
        %v910 = vmul.f32 %v902, %v909
        %v911 = vld [vmem:[#allocation12] sm:$0x1]
        %v913 = vlaneseq
        %v914 = vshrl.u32 %v913, 7
        %v915 = vsub.s32 0, %v914
        %v916 = vrot.slane %v911, %v915
        %v918 = vmul.f32 %v910, %v916
        %v919 = vld [vmem:[#allocation13] sm:$0x1]
        %v921 = vlaneseq
        %v922 = vshrl.u32 %v921, 7
        %v923 = vsub.s32 0, %v922
        %v924 = vrot.slane %v919, %v923
        %v926 = vadd.f32 %v918, %v924
        %v927 = vmul.f32 %v926, 0.5
        %v928 = vmul.f32 %v926, 0.70710677
        %v929 = verf.f32.pop %v928
        %v930 = vadd.f32 %v929, 1.0
        %v931 = vmul.f32 %v927, %v930
        %s932 = smul.u32 %s33, 8
        %v933 = vlaneseq
        %v934 = vshrl.u32 %v933, 7
        %v935 = vstv %s932
        %v936 = vadd.s32 %v935, %v934
        %vm937 = vcmp.ge.s32.totalorder %v936, 1
        %vm938 = vcmp.lt.s32.totalorder %v936, 17
        %vm939 = vmand %vm937, %vm938
        %v940 = vsel %vm939, 1, 0
        %vm941 = vcmp.eq.s32.totalorder %v940, 1
        %v942 = vsel %vm941, %v931, 0.0
        %943 = vst.msk [vmem:[%s386] sm:$0xff] %vm391, %v942
        %s944 = sand.u32 %s196, 1
        %s945 = scalar_lea.sflag [#allocation6], %s944
        %s946 = sand.u32 %s196, 1
        %s947 = smul.addr %s946, 8
        %s948 = scalar_lea.vmem [#allocation15], %s947
        // Predicated region
        $region69: #{tpu_custom_call.1} parent=43 // pred_check
          %p949 = pneg %p206
        $region70: #{tpu_custom_call.1} parent=43 // pred_check_branch
          %951 = sbr.rel (%p949) target = $region72
        $region71: #{tpu_custom_call.1} parent=43 // pred_region
          %s953 = ssub.s32 128, 128
          %954 = vsyncadd %s945, %s953
          %s955 = smul.addr %s32, 4
          %s956 = sadd.s32 %s33, %s955
          %s957 = smul.addr %s956, 128
          %s958 = scalar_lea.hbm %s6, %s957
          %s960 = sshll.u32 %s948, 4
          %s961 = int_to_ptr.vmem [resolvable:$true] %s960
          %963 = dma.vmem_to_hbm [thread:$0]  %s961, 128, %s958, %s945
        $region72: #{tpu_custom_call.1} parent=43 // pred_fallthru
          _
      $region44: #{tpu_custom_call.1} parent=5 // pred_fallthru
        _
      %p964 = scmp.le.s32.totalorder 2, %s23
      // Predicated region
      $region73: #{tpu_custom_call.1} parent=5 // pred_check
        %p965 = pneg %p964
      $region74: #{tpu_custom_call.1} parent=5 // pred_check_branch
        %967 = sbr.rel (%p965) target = $region76
      $region75: #{tpu_custom_call.1} parent=5 // pred_region
        %s968 = ssub.s32 %s23, 2
        // Predicated region
        $region77: #{tpu_custom_call.1} parent=75 // pred_check
          %p969 = pneg %p212
        $region78: #{tpu_custom_call.1} parent=75 // pred_check_branch
          %971 = sbr.rel (%p969) target = $region80
        $region79: #{tpu_custom_call.1} parent=75 // pred_region
          %s972 = sand.u32 %s197, 1
          %s973 = scalar_lea.sflag [#allocation6], %s972
          %s974 = sand.u32 %s197, 1
          %s975 = smul.addr %s974, 8
          %s976 = scalar_lea.vmem [#allocation15], %s975
          %977 = dma.done %s973, 128
        $region80: #{tpu_custom_call.1} parent=75 // pred_fallthru
          _
      $region76: #{tpu_custom_call.1} parent=5 // pred_fallthru
        _
    $region6: #{tpu_custom_call.1} parent=1 // loop_footer
      %s27 = sadd.s32 1, %s23
    $region7: #{tpu_custom_call.1} parent=1 // loop_footer_branch
      %22 = sbr.rel target = $region3
    $region8: #{tpu_custom_call.1} parent=1 // loop_exit
      _
    %978 = vsyncpa [#allocation5], 1
    %s979 = scalar_lea.sflag [#allocation5], 1
    %980 = vsyncpa %s979, 1
    %981 = vsyncpa [#allocation8], 1
    %s982 = scalar_lea.sflag [#allocation8], 1
    %983 = vsyncpa %s982, 1
    %984 = vsyncpa [#allocation11], 1
    %985 = vsyncpa [#allocation14], 1
    %986 = vsyncpa [#allocation6], 1
    %s987 = scalar_lea.sflag [#allocation6], 1
    %988 = vsyncpa %s987, 1

</llo_original>
